<compile_context>
chip_gen: v6e
topology: v6e:2x2x1
jax: 0.10.0
libtpu: 0.0.40
codegen_flags: <defaults>
</compile_context>

<pallas_src>
import jax
import jax.numpy as jnp
from jax.experimental import pallas as pl
from jax.experimental.pallas import tpu as pltpu


# Double-buffered output-block VMEM budget (bytes); comfortably inside
# v7x's 64 MiB physical / 32 MiB scoped VMEM and v5e/v6e limits.
_VMEM_BUDGET = 24 * 1024 * 1024


def constant_kernel(bias_ref, o_ref):
    # bias_ref: (Rt, 1) per-row constants; o_ref: (Rt, TT) output tile.
    # In-kernel lane broadcast (cheap VPU/XLU copy, hidden under the store
    # slot) followed by one unmasked full-block store.
    o_ref[...] = jnp.broadcast_to(bias_ref[...], o_ref.shape)


def _row_tile(R, max_rows=512):
    """Largest multiple-of-8 divisor of R (capped); full R if R % 8 != 0
    (a full-extent block is always legal)."""
    if R % 8 != 0:
        return R
    rt = min(R, max_rows)
    rt -= rt % 8
    while R % rt != 0:
        rt -= 8
    return max(rt, 8)


def _lane_tile(Tp, Rt, budget=_VMEM_BUDGET):
    """Largest multiple-of-128 divisor of Tp whose double-buffered (Rt, tt)
    f32 output block fits the VMEM budget. Tp is already a multiple of 128."""
    max_tt = (budget // (2 * 4 * Rt)) // 128 * 128
    tt = max(min(Tp, max_tt), 128)
    while Tp % tt != 0:
        tt -= 128
    return tt


def constant_model_forward(x, bias):
    """x: (B, C_in, T) float32 (only shape used); bias: (1, F, 1) float32."""
    B, _, T = x.shape
    assert bias.ndim == 3 and bias.shape[0] == 1 and bias.shape[2] == 1, bias.shape
    F = bias.shape[1]

    R = B * F                            # collapsed (batch, feature) row axis
    Tp = ((T + 127) // 128) * 128        # pad lanes -> unmasked stores only
    Rt = _row_tile(R)
    TT = _lane_tile(Tp, Rt)
    grid = (R // Rt, Tp // TT)

    # Per-row constant column (R, 1): only R*4 bytes of HBM traffic.
    # Row r = b*F + f maps to bias[f]; broadcast over lanes happens in-kernel.
    bias_rows = jnp.tile(bias.reshape(F).astype(jnp.float32), B).reshape(R, 1)

    out_block_bytes = Rt * TT * 4
    bias_block_bytes = Rt * 128 * 4      # (Rt, 1) pads to 128 lanes in VMEM
    vmem_limit = max(2 * (out_block_bytes + bias_block_bytes) + (2 << 20),
                     16 * 1024 * 1024)

    out = pl.pallas_call(
        constant_kernel,
        out_shape=jax.ShapeDtypeStruct((R, Tp), jnp.float32),
        grid_spec=pltpu.PrefetchScalarGridSpec(
            num_scalar_prefetch=0,
            grid=grid,
            in_specs=[pl.BlockSpec((Rt, 1), lambda r, t: (r, 0))],
            out_specs=pl.BlockSpec((Rt, TT), lambda r, t: (r, t)),
        ),
        compiler_params=pltpu.CompilerParams(
            dimension_semantics=("parallel", "parallel"),
            vmem_limit_bytes=int(vmem_limit),
        ),
    )(bias_rows)

    if Tp != T:
        out = out[:, :T]                 # drop lane padding
    return out.reshape(B, F, T)          # free, contiguous reshape


if __name__ == "__main__":
    key = jax.random.PRNGKey(0)

    # hyperparameter_dict = {'out_features': 4}
    out_features = 4
    B, C_in, T = 2, 4, 16

    # Deterministic parameter init, matching the module:
    # bias = arange(out_features).reshape(1, out_features, 1).float()
    bias = jnp.arange(out_features, dtype=jnp.float32).reshape(1, out_features, 1)

    x = jax.random.normal(key, (B, C_in, T), dtype=jnp.float32)

    out = constant_model_forward(x, bias)
    out = jax.block_until_ready(out)

    # Reference check (pure JAX, mirrors the PyTorch forward exactly).
    ref = jnp.zeros((B, out_features, T), dtype=jnp.float32) + bias
    assert out.shape == (B, out_features, T)
    assert out.dtype == jnp.float32
    assert jnp.allclose(out, ref)

    print("KERNEL_OK")
</pallas_src>

<mosaic_0001>
module attributes {stable_mosaic.version = 11 : i64} {
  func.func @constant_kernel(%arg0: i32, %arg1: i32, %arg2: memref<8x1xf32, #tpu.memory_space<vmem>>, %arg3: memref<8x128xf32, #tpu.memory_space<vmem>>) attributes {dimension_semantics = [#tpu.dimension_semantics<parallel>, #tpu.dimension_semantics<parallel>], iteration_bounds = array<i64: 1, 1>, scalar_prefetch = 0 : i64, scratch_operands = 0 : i64, tpu.core_type = #tpu.core_type<tc>, window_params = [{transform_indices = @transform_0, window_bounds = array<i64: 8, 1>}, {transform_indices = @transform_1, window_bounds = array<i64: 8, 128>}]} {
    %c0 = arith.constant 0 : index
    %c0_0 = arith.constant 0 : index
    %0 = vector.load %arg2[%c0, %c0_0] : memref<8x1xf32, #tpu.memory_space<vmem>>, vector<8x1xf32>
    %1 = vector.shape_cast %0 : vector<8x1xf32> to vector<8x1xf32>
    %2 = vector.broadcast %1 : vector<8x1xf32> to vector<8x128xf32>
    %c0_1 = arith.constant 0 : index
    %c0_2 = arith.constant 0 : index
    %3 = vector.load %arg3[%c0_1, %c0_2] : memref<8x128xf32, #tpu.memory_space<vmem>>, vector<8x128xf32>
    tpu.vector_store %arg3[%c0_1, %c0_2], %2 {strides = array<i32>} : memref<8x128xf32, #tpu.memory_space<vmem>>, vector<8x128xf32>,
    return
  }
  func.func @transform_0(%arg0: i32, %arg1: i32) -> (i32, i32) {
    %c0_i32 = arith.constant 0 : i32
    %c0_i32_0 = arith.constant 0 : i32
    return %arg0, %c0_i32 : i32, i32
  }
  func.func @transform_1(%arg0: i32, %arg1: i32) -> (i32, i32) {
    %c0_i32 = arith.constant 0 : i32
    return %arg0, %arg1 : i32, i32
  }
}

</mosaic_0001>

<llo_original>
// kernel: tpu_custom_call.1
$region0: #{tpu_custom_call.1}
  #allocation0 [shape = 'u32[]', space=smem, size = 0x4, offset = 0x4, fixed_abs, tag = 'smem constant byte address 0x4 - core index']
  #allocation1 [shape = 'u32[144,128]{1,0:T(1,128)}', space=vmem, size = 0x12000, scoped, tag = 'internal scratch']
  %s0 = inlined_call_operand.vmem [shape: f32[8,1], index: 0, kind: input, shape index: {}]
  %s1 = inlined_call_operand.hbm [shape: f32[8,128], index: 1, kind: output, shape index: {}]
  %s2 = sld [smem:[#allocation0]]
  $region14: #{tpu_custom_call.1} parent=0
    _
  %s4 = ssub.s32 1, %s2
  %s5 = scalar_select 0, %s4, %s2
  $region1: #{tpu_custom_call.1} parent=0
    #allocation2 [shape = 'u8[4096]{0}', space=vmem, size = 0x1000, scoped, tag = 'output window, operand 0, single buffered']
    #allocation3 [shape = 's32[1]{0}', space=sflag, size = 0x4, scoped, tag = 'scoped memory for tpu_custom_call.1']
    %6 = vsyncpa [#allocation3], 0
    // Predicated region
    $region2: #{tpu_custom_call.1} parent=1 // pred_check
      _
    $region3: #{tpu_custom_call.1} parent=1 // pred_check_branch
      %8 = sbr.rel (0) target = $region5
    $region4: #{tpu_custom_call.1} parent=1 // pred_region
      _
    $region5: #{tpu_custom_call.1} parent=1 // pred_fallthru
      _
    %v9 = vld [vmem:[%s0] sm:$0xff]
    %11 = vset.pattern.permute.xlu0 0
    %12 = vperm.xlu0 %11, %v9
    %v13 = vpop.permute.xlu0 %12
    %15 = vst [vmem:[#allocation2] sm:$0xff] %v13
    // Predicated region
    $region6: #{tpu_custom_call.1} parent=1 // pred_check
      _
    $region7: #{tpu_custom_call.1} parent=1 // pred_check_branch
      %17 = sbr.rel (0) target = $region9
    $region8: #{tpu_custom_call.1} parent=1 // pred_region
      %s19 = ssub.s32 128, 128
      %20 = vsyncadd [#allocation3], %s19
      %s22 = sshll.u32 [#allocation2], 4
      %s23 = int_to_ptr.vmem [resolvable:$true] %s22
      %25 = dma.vmem_to_hbm [thread:$0]  %s23, 128, %s1, [#allocation3]
    $region9: #{tpu_custom_call.1} parent=1 // pred_fallthru
      _
    // Predicated region
    $region10: #{tpu_custom_call.1} parent=1 // pred_check
      _
    $region11: #{tpu_custom_call.1} parent=1 // pred_check_branch
      %27 = sbr.rel (0) target = $region13
    $region12: #{tpu_custom_call.1} parent=1 // pred_region
      %28 = dma.done [#allocation3], 128
    $region13: #{tpu_custom_call.1} parent=1 // pred_fallthru
      _
    %29 = vsyncpa [#allocation3], 1

</llo_original>
